<compile_context>
chip_gen: v5e
topology: v5e:2x2
jax: 0.10.0
libtpu: 0.0.40
codegen_flags: <defaults>
</compile_context>

<pallas_src>
import jax
import jax.numpy as jnp
from jax import lax
from jax.experimental import pallas as pl
from jax.experimental.pallas import tpu as pltpu


def _round_up(x, m):
    return ((x + m - 1) // m) * m


def determ_policy_kernel(obs_ref,
                         w0t_ref, b0_ref,
                         w1t_ref, b1_ref,
                         w2t_ref, b2_ref,
                         scale_ref, offset_ref,
                         out_ref):
    """One batch tile, feature-major: activations are (features, TB).

    h0 = relu(W0^T X^T + b0); h1 = relu(W1^T h0 + b1); y = W2^T h1 + b2
    action = scale * tanh(y) + offset   (scale/offset precomputed in wrapper)
    """
    x = obs_ref[...]  # (TB, obs_dim), row-major as stored in HBM

    # (h0_dim, TB) = w0t (h0_dim, obs_dim) contracted with x (TB, obs_dim) on
    # the obs axis -> canonical "A @ B.T" MXU form (operand transpose handled
    # by Mosaic, no materialized relayout of the batch tile).
    h0 = lax.dot_general(w0t_ref[...], x,
                         dimension_numbers=(((1,), (1,)), ((), ())),
                         preferred_element_type=jnp.float32)
    h0 = jnp.maximum(h0 + b0_ref[...], 0.0)          # (h0_dim, 1) lane-broadcast

    h1 = jnp.dot(w1t_ref[...], h0, preferred_element_type=jnp.float32)
    h1 = jnp.maximum(h1 + b1_ref[...], 0.0)

    y = jnp.dot(w2t_ref[...], h1, preferred_element_type=jnp.float32)
    y = y + b2_ref[...]

    # (act_dim, TB): lane-dense store (TB is a multiple of 128).
    out_ref[...] = (scale_ref[...] * jnp.tanh(y) + offset_ref[...]).astype(out_ref.dtype)


def determ_policy_forward(obs, params, act_high_lim, act_low_lim, *, block_b=8192):
    """Batch-tiled Pallas call; returns actions of shape (B, act_dim).

    block_b: batch tile size (rounded to a multiple of 128).  Weights / biases /
    rescale columns (<20 KiB total) use constant index_maps so they stay
    VMEM-resident across grid steps; only the obs tile and the (act_dim, TB)
    output slab stream through the pipeline.
    """
    (w0, b0), (w1, b1), (w2, b2) = params
    B, obs_dim = obs.shape
    h0_dim = w0.shape[1]
    h1_dim = w1.shape[1]
    act_dim = w2.shape[1]

    obs = obs.astype(jnp.float32)
    # TODO(synk): on bandwidth-starved v5e, optionally stream obs/weights as
    # bfloat16 (keep f32 MXU accumulation) for ~1.5x roofline if accuracy allows.

    # Pre-transpose the tiny weights once; biases / rescale become (feat, 1)
    # columns that lane-broadcast against (feat, TB) activations.
    w0t = jnp.asarray(w0, jnp.float32).T                       # (h0_dim, obs_dim)
    w1t = jnp.asarray(w1, jnp.float32).T                       # (h1_dim, h0_dim)
    w2t = jnp.asarray(w2, jnp.float32).T                       # (act_dim, h1_dim)
    b0c = jnp.asarray(b0, jnp.float32).reshape(h0_dim, 1)
    b1c = jnp.asarray(b1, jnp.float32).reshape(h1_dim, 1)
    b2c = jnp.asarray(b2, jnp.float32).reshape(act_dim, 1)
    scale = ((act_high_lim - act_low_lim) * 0.5).astype(jnp.float32).reshape(act_dim, 1)
    offset = ((act_high_lim + act_low_lim) * 0.5).astype(jnp.float32).reshape(act_dim, 1)

    # Batch tile: multiple of 128 (lane-dense output stores), capped at what the
    # batch actually needs.  Pad only when B % tb != 0 (aligned batches pay no
    # extra HBM pass); padded rows compute on zeros and are dropped below.
    block_b = max(128, _round_up(block_b, 128))
    tb = min(block_b, _round_up(B, 128))
    b_pad = _round_up(B, tb)
    if b_pad != B:
        obs = jnp.pad(obs, ((0, b_pad - B), (0, 0)))

    grid = (b_pad // tb,)

    # VMEM footprint: double-buffered obs tile (obs_dim lane-padded to 128),
    # double-buffered out slab (act_dim padded to 8 sublanes), intermediates,
    # resident weights.  Keep a generous margin; default tb=8192 stays well
    # under v7x's 64 MiB physical VMEM.
    weight_bytes = (obs_dim * h0_dim + h0_dim * h1_dim + h1_dim * act_dim
                    + h0_dim + h1_dim + 3 * act_dim) * 4
    vmem_est = (2 * tb * 128 * 4            # obs blocks (lane padded)
                + 2 * 8 * tb * 4            # out blocks (sublane padded)
                + 4 * h0_dim * tb * 4       # intermediates headroom
                + weight_bytes)
    vmem_limit = max(48 * 1024 * 1024, int(vmem_est * 3 // 2))

    flops = 2 * (obs_dim * h0_dim + h0_dim * h1_dim + h1_dim * act_dim) * b_pad
    bytes_accessed = (obs_dim + act_dim) * 4 * b_pad + weight_bytes

    out_fm = pl.pallas_call(
        determ_policy_kernel,
        out_shape=jax.ShapeDtypeStruct((act_dim, b_pad), jnp.float32),
        grid=grid,
        in_specs=[
            # streamed per grid step
            pl.BlockSpec((tb, obs_dim), lambda i: (i, 0)),
            # weights / biases / rescale: constant index_map -> VMEM-resident
            pl.BlockSpec((h0_dim, obs_dim), lambda i: (0, 0)),
            pl.BlockSpec((h0_dim, 1), lambda i: (0, 0)),
            pl.BlockSpec((h1_dim, h0_dim), lambda i: (0, 0)),
            pl.BlockSpec((h1_dim, 1), lambda i: (0, 0)),
            pl.BlockSpec((act_dim, h1_dim), lambda i: (0, 0)),
            pl.BlockSpec((act_dim, 1), lambda i: (0, 0)),
            pl.BlockSpec((act_dim, 1), lambda i: (0, 0)),
            pl.BlockSpec((act_dim, 1), lambda i: (0, 0)),
        ],
        out_specs=pl.BlockSpec((act_dim, tb), lambda i: (0, i)),
        compiler_params=pltpu.CompilerParams(
            dimension_semantics=("parallel",),   # shard batch tiles across TCs on v7x
            vmem_limit_bytes=vmem_limit,
        ),
        cost_estimate=pl.CostEstimate(
            flops=flops,
            transcendentals=act_dim * b_pad,
            bytes_accessed=bytes_accessed,
        ),
    )(obs, w0t, b0c, w1t, b1c, w2t, b2c, scale, offset)

    # (act_dim, b_pad) -> (B, act_dim): tiny 16 B/row slice+transpose, fused by XLA.
    return out_fm[:, :B].T


def init_params(key, sizes):
    """Deterministic init mimicking nn.Linear's U(-1/sqrt(fan_in), 1/sqrt(fan_in))."""
    params = []
    for j in range(len(sizes) - 1):
        key, kw, kb = jax.random.split(key, 3)
        fan_in = sizes[j]
        bound = 1.0 / jnp.sqrt(fan_in)
        w = jax.random.uniform(kw, (sizes[j], sizes[j + 1]),
                               minval=-bound, maxval=bound, dtype=jnp.float32)
        b = jax.random.uniform(kb, (sizes[j + 1],),
                               minval=-bound, maxval=bound, dtype=jnp.float32)
        params.append((w, b))
    return params


def reference_forward(obs, params, act_high_lim, act_low_lim):
    """Pure-JAX reference for correctness check."""
    (w0, b0), (w1, b1), (w2, b2) = params
    h = jnp.maximum(obs @ w0 + b0, 0.0)
    h = jnp.maximum(h @ w1 + b1, 0.0)
    y = h @ w2 + b2
    return (act_high_lim - act_low_lim) / 2.0 * jnp.tanh(y) + \
           (act_high_lim + act_low_lim) / 2.0


if __name__ == "__main__":
    # Shapes consistent with the module: obs_dim=8, hidden_sizes=(32, 32), act_dim=4
    obs_dim, act_dim = 8, 4
    hidden_sizes = (32, 32)

    key = jax.random.PRNGKey(0)
    pi_sizes = [obs_dim] + list(hidden_sizes) + [act_dim]
    key, k_params = jax.random.split(key)
    params = init_params(k_params, pi_sizes)

    act_high_lim = jnp.array([1.0, 2.0, 0.5, 3.0], dtype=jnp.float32)
    act_low_lim = jnp.array([-1.0, -2.0, -0.5, -1.0], dtype=jnp.float32)

    # --- small single-env style batch (single grid step, padded tail) ---
    key, k_obs = jax.random.split(key)
    obs_small = jax.random.normal(k_obs, (4, obs_dim), dtype=jnp.float32)
    act_small = jax.block_until_ready(
        determ_policy_forward(obs_small, params, act_high_lim, act_low_lim))
    ref_small = reference_forward(obs_small, params, act_high_lim, act_low_lim)
    assert act_small.shape == (4, act_dim)
    assert jnp.allclose(act_small, ref_small, atol=1e-5, rtol=1e-5), "small-batch mismatch"

    # --- multi-tile batch (exercises grid, resident weights, tail padding) ---
    key, k_obs2 = jax.random.split(key)
    obs_big = jax.random.normal(k_obs2, (300, obs_dim), dtype=jnp.float32)
    act_big = jax.block_until_ready(
        determ_policy_forward(obs_big, params, act_high_lim, act_low_lim, block_b=128))
    ref_big = reference_forward(obs_big, params, act_high_lim, act_low_lim)
    assert act_big.shape == (300, act_dim)
    assert jnp.allclose(act_big, ref_big, atol=1e-5, rtol=1e-5), "tiled-batch mismatch"

    print("KERNEL_OK")
</pallas_src>

<mosaic_0001>
module attributes {stable_mosaic.version = 11 : i64} {
  func.func @determ_policy_kernel(%arg0: i32, %arg1: memref<128x8xf32, #tpu.memory_space<vmem>>, %arg2: memref<32x8xf32, #tpu.memory_space<vmem>>, %arg3: memref<32x1xf32, #tpu.memory_space<vmem>>, %arg4: memref<32x32xf32, #tpu.memory_space<vmem>>, %arg5: memref<32x1xf32, #tpu.memory_space<vmem>>, %arg6: memref<4x32xf32, #tpu.memory_space<vmem>>, %arg7: memref<4x1xf32, #tpu.memory_space<vmem>>, %arg8: memref<4x1xf32, #tpu.memory_space<vmem>>, %arg9: memref<4x1xf32, #tpu.memory_space<vmem>>, %arg10: memref<4x128xf32, #tpu.memory_space<vmem>>) attributes {dimension_semantics = [#tpu.dimension_semantics<parallel>], iteration_bounds = array<i64: 1>, scalar_prefetch = 0 : i64, scratch_operands = 0 : i64, tpu.core_type = #tpu.core_type<tc>, window_params = [{transform_indices = @transform_0, window_bounds = array<i64: 128, 8>}, {pipeline_mode = #tpu.pipeline_mode<synchronous>, transform_indices = @transform_1, window_bounds = array<i64: 32, 8>}, {pipeline_mode = #tpu.pipeline_mode<synchronous>, transform_indices = @transform_2, window_bounds = array<i64: 32, 1>}, {pipeline_mode = #tpu.pipeline_mode<synchronous>, transform_indices = @transform_3, window_bounds = array<i64: 32, 32>}, {pipeline_mode = #tpu.pipeline_mode<synchronous>, transform_indices = @transform_4, window_bounds = array<i64: 32, 1>}, {pipeline_mode = #tpu.pipeline_mode<synchronous>, transform_indices = @transform_5, window_bounds = array<i64: 4, 32>}, {pipeline_mode = #tpu.pipeline_mode<synchronous>, transform_indices = @transform_6, window_bounds = array<i64: 4, 1>}, {pipeline_mode = #tpu.pipeline_mode<synchronous>, transform_indices = @transform_7, window_bounds = array<i64: 4, 1>}, {pipeline_mode = #tpu.pipeline_mode<synchronous>, transform_indices = @transform_8, window_bounds = array<i64: 4, 1>}, {transform_indices = @transform_9, window_bounds = array<i64: 4, 128>}]} {
    %c0 = arith.constant 0 : index
    %c0_0 = arith.constant 0 : index
    %0 = vector.load %arg1[%c0, %c0_0] : memref<128x8xf32, #tpu.memory_space<vmem>>, vector<128x8xf32>
    %c0_1 = arith.constant 0 : index
    %c0_2 = arith.constant 0 : index
    %1 = vector.load %arg2[%c0_1, %c0_2] : memref<32x8xf32, #tpu.memory_space<vmem>>, vector<32x8xf32>
    %cst = arith.constant dense<0.000000e+00> : vector<32x128xf32>
    %2 = tpu.matmul %1, %0, %cst {dimension_numbers = #tpu.dot_dimension_numbers<[1], [1], [0], [0], [0, 0, 1, 0], [], []>} : vector<32x8xf32>, vector<128x8xf32>, vector<32x128xf32> -> vector<32x128xf32>
    %c0_3 = arith.constant 0 : index
    %c0_4 = arith.constant 0 : index
    %3 = vector.load %arg3[%c0_3, %c0_4] : memref<32x1xf32, #tpu.memory_space<vmem>>, vector<32x1xf32>
    %4 = vector.broadcast %3 : vector<32x1xf32> to vector<32x128xf32>
    %5 = arith.addf %2, %4 : vector<32x128xf32>
    %cst_5 = arith.constant 0.000000e+00 : f32
    %6 = vector.broadcast %cst_5 : f32 to vector<32x128xf32>
    %7 = arith.maximumf %5, %6 : vector<32x128xf32>
    %c0_6 = arith.constant 0 : index
    %c0_7 = arith.constant 0 : index
    %8 = vector.load %arg4[%c0_6, %c0_7] : memref<32x32xf32, #tpu.memory_space<vmem>>, vector<32x32xf32>
    %cst_8 = arith.constant dense<0.000000e+00> : vector<32x128xf32>
    %9 = tpu.matmul %8, %7, %cst_8 {dimension_numbers = #tpu.dot_dimension_numbers<[1], [0], [0], [1], [0, 0, 1, 1], [], []>} : vector<32x32xf32>, vector<32x128xf32>, vector<32x128xf32> -> vector<32x128xf32>
    %c0_9 = arith.constant 0 : index
    %c0_10 = arith.constant 0 : index
    %10 = vector.load %arg5[%c0_9, %c0_10] : memref<32x1xf32, #tpu.memory_space<vmem>>, vector<32x1xf32>
    %11 = vector.broadcast %10 : vector<32x1xf32> to vector<32x128xf32>
    %12 = arith.addf %9, %11 : vector<32x128xf32>
    %cst_11 = arith.constant 0.000000e+00 : f32
    %13 = vector.broadcast %cst_11 : f32 to vector<32x128xf32>
    %14 = arith.maximumf %12, %13 : vector<32x128xf32>
    %c0_12 = arith.constant 0 : index
    %c0_13 = arith.constant 0 : index
    %15 = vector.load %arg6[%c0_12, %c0_13] : memref<4x32xf32, #tpu.memory_space<vmem>>, vector<4x32xf32>
    %cst_14 = arith.constant dense<0.000000e+00> : vector<4x128xf32>
    %16 = tpu.matmul %15, %14, %cst_14 {dimension_numbers = #tpu.dot_dimension_numbers<[1], [0], [0], [1], [0, 0, 1, 1], [], []>} : vector<4x32xf32>, vector<32x128xf32>, vector<4x128xf32> -> vector<4x128xf32>
    %c0_15 = arith.constant 0 : index
    %c0_16 = arith.constant 0 : index
    %17 = vector.load %arg7[%c0_15, %c0_16] : memref<4x1xf32, #tpu.memory_space<vmem>>, vector<4x1xf32>
    %18 = vector.broadcast %17 : vector<4x1xf32> to vector<4x128xf32>
    %19 = arith.addf %16, %18 : vector<4x128xf32>
    %c0_17 = arith.constant 0 : index
    %c0_18 = arith.constant 0 : index
    %20 = vector.load %arg8[%c0_17, %c0_18] : memref<4x1xf32, #tpu.memory_space<vmem>>, vector<4x1xf32>
    %21 = math.tanh %19 : vector<4x128xf32>
    %22 = vector.broadcast %20 : vector<4x1xf32> to vector<4x128xf32>
    %23 = arith.mulf %22, %21 : vector<4x128xf32>
    %c0_19 = arith.constant 0 : index
    %c0_20 = arith.constant 0 : index
    %24 = vector.load %arg9[%c0_19, %c0_20] : memref<4x1xf32, #tpu.memory_space<vmem>>, vector<4x1xf32>
    %25 = vector.broadcast %24 : vector<4x1xf32> to vector<4x128xf32>
    %26 = arith.addf %23, %25 : vector<4x128xf32>
    %c0_21 = arith.constant 0 : index
    %c0_22 = arith.constant 0 : index
    %27 = vector.load %arg10[%c0_21, %c0_22] : memref<4x128xf32, #tpu.memory_space<vmem>>, vector<4x128xf32>
    tpu.vector_store %arg10[%c0_21, %c0_22], %26 {strides = array<i32>} : memref<4x128xf32, #tpu.memory_space<vmem>>, vector<4x128xf32>,
    return
  }
  func.func @transform_0(%arg0: i32) -> (i32, i32) {
    %c0_i32 = arith.constant 0 : i32
    %c0_i32_0 = arith.constant 0 : i32
    return %arg0, %c0_i32 : i32, i32
  }
  func.func @transform_1(%arg0: i32) -> (i32, i32) {
    %c0_i32 = arith.constant 0 : i32
    %c0_i32_0 = arith.constant 0 : i32
    %c0_i32_1 = arith.constant 0 : i32
    return %c0_i32, %c0_i32_0 : i32, i32
  }
  func.func @transform_2(%arg0: i32) -> (i32, i32) {
    %c0_i32 = arith.constant 0 : i32
    %c0_i32_0 = arith.constant 0 : i32
    %c0_i32_1 = arith.constant 0 : i32
    return %c0_i32, %c0_i32_0 : i32, i32
  }
  func.func @transform_3(%arg0: i32) -> (i32, i32) {
    %c0_i32 = arith.constant 0 : i32
    %c0_i32_0 = arith.constant 0 : i32
    %c0_i32_1 = arith.constant 0 : i32
    return %c0_i32, %c0_i32_0 : i32, i32
  }
  func.func @transform_4(%arg0: i32) -> (i32, i32) {
    %c0_i32 = arith.constant 0 : i32
    %c0_i32_0 = arith.constant 0 : i32
    %c0_i32_1 = arith.constant 0 : i32
    return %c0_i32, %c0_i32_0 : i32, i32
  }
  func.func @transform_5(%arg0: i32) -> (i32, i32) {
    %c0_i32 = arith.constant 0 : i32
    %c0_i32_0 = arith.constant 0 : i32
    %c0_i32_1 = arith.constant 0 : i32
    return %c0_i32, %c0_i32_0 : i32, i32
  }
  func.func @transform_6(%arg0: i32) -> (i32, i32) {
    %c0_i32 = arith.constant 0 : i32
    %c0_i32_0 = arith.constant 0 : i32
    %c0_i32_1 = arith.constant 0 : i32
    return %c0_i32, %c0_i32_0 : i32, i32
  }
  func.func @transform_7(%arg0: i32) -> (i32, i32) {
    %c0_i32 = arith.constant 0 : i32
    %c0_i32_0 = arith.constant 0 : i32
    %c0_i32_1 = arith.constant 0 : i32
    return %c0_i32, %c0_i32_0 : i32, i32
  }
  func.func @transform_8(%arg0: i32) -> (i32, i32) {
    %c0_i32 = arith.constant 0 : i32
    %c0_i32_0 = arith.constant 0 : i32
    %c0_i32_1 = arith.constant 0 : i32
    return %c0_i32, %c0_i32_0 : i32, i32
  }
  func.func @transform_9(%arg0: i32) -> (i32, i32) {
    %c0_i32 = arith.constant 0 : i32
    %c0_i32_0 = arith.constant 0 : i32
    return %c0_i32, %arg0 : i32, i32
  }
}

</mosaic_0001>

<llo_original>
// kernel: tpu_custom_call.1
$region0: #{tpu_custom_call.1}
  #allocation0 [shape = 'u32[]', space=smem, size = 0x4, offset = 0x4, fixed_abs, tag = 'smem constant byte address 0x4 - core index']
  #allocation1 [shape = 'u32[72,128]{1,0:T(1,128)}', space=vmem, size = 0x9000, scoped, tag = 'internal scratch']
  %s0 = inlined_call_operand.vmem [shape: f32[128,8], index: 0, kind: input, shape index: {}]
  %s1 = inlined_call_operand.vmem [shape: f32[32,8], index: 1, kind: input, shape index: {}]
  %s2 = inlined_call_operand.vmem [shape: f32[32,1], index: 2, kind: input, shape index: {}]
  %s3 = inlined_call_operand.vmem [shape: f32[32,32], index: 3, kind: input, shape index: {}]
  %s4 = inlined_call_operand.vmem [shape: f32[32,1], index: 4, kind: input, shape index: {}]
  %s5 = inlined_call_operand.vmem [shape: f32[4,32], index: 5, kind: input, shape index: {}]
  %s6 = inlined_call_operand.vmem [shape: f32[4,1], index: 6, kind: input, shape index: {}]
  %s7 = inlined_call_operand.vmem [shape: f32[4,1], index: 7, kind: input, shape index: {}]
  %s8 = inlined_call_operand.vmem [shape: f32[4,1], index: 8, kind: input, shape index: {}]
  %s9 = inlined_call_operand.hbm [shape: f32[4,128], index: 9, kind: output, shape index: {}]
  %s10 = sld [smem:[#allocation0]]
  $region46: #{tpu_custom_call.1} parent=0
    _
  %s12 = ssub.s32 1, %s10
  %s13 = scalar_select 0, %s12, %s10
  $region1: #{tpu_custom_call.1} parent=0
    #allocation2 [shape = 'u8[2048]{0}', space=vmem, size = 0x800, scoped, tag = 'output window, operand 0, single buffered']
    #allocation3 [shape = 's32[1]{0}', space=sflag, size = 0x4, scoped, tag = 'scoped memory for tpu_custom_call.1']
    %14 = vsyncpa [#allocation3], 0
    // Predicated region
    $region2: #{tpu_custom_call.1} parent=1 // pred_check
      _
    $region3: #{tpu_custom_call.1} parent=1 // pred_check_branch
      %16 = sbr.rel (0) target = $region5
    $region4: #{tpu_custom_call.1} parent=1 // pred_region
      _
    $region5: #{tpu_custom_call.1} parent=1 // pred_fallthru
      _
    // Predicated region
    $region6: #{tpu_custom_call.1} parent=1 // pred_check
      _
    $region7: #{tpu_custom_call.1} parent=1 // pred_check_branch
      %18 = sbr.rel (0) target = $region9
    $region8: #{tpu_custom_call.1} parent=1 // pred_region
      _
    $region9: #{tpu_custom_call.1} parent=1 // pred_fallthru
      _
    // Predicated region
    $region10: #{tpu_custom_call.1} parent=1 // pred_check
      _
    $region11: #{tpu_custom_call.1} parent=1 // pred_check_branch
      %20 = sbr.rel (0) target = $region13
    $region12: #{tpu_custom_call.1} parent=1 // pred_region
      _
    $region13: #{tpu_custom_call.1} parent=1 // pred_fallthru
      _
    // Predicated region
    $region14: #{tpu_custom_call.1} parent=1 // pred_check
      _
    $region15: #{tpu_custom_call.1} parent=1 // pred_check_branch
      %22 = sbr.rel (0) target = $region17
    $region16: #{tpu_custom_call.1} parent=1 // pred_region
      _
    $region17: #{tpu_custom_call.1} parent=1 // pred_fallthru
      _
    // Predicated region
    $region18: #{tpu_custom_call.1} parent=1 // pred_check
      _
    $region19: #{tpu_custom_call.1} parent=1 // pred_check_branch
      %24 = sbr.rel (0) target = $region21
    $region20: #{tpu_custom_call.1} parent=1 // pred_region
      _
    $region21: #{tpu_custom_call.1} parent=1 // pred_fallthru
      _
    // Predicated region
    $region22: #{tpu_custom_call.1} parent=1 // pred_check
      _
    $region23: #{tpu_custom_call.1} parent=1 // pred_check_branch
      %26 = sbr.rel (0) target = $region25
    $region24: #{tpu_custom_call.1} parent=1 // pred_region
      _
    $region25: #{tpu_custom_call.1} parent=1 // pred_fallthru
      _
    // Predicated region
    $region26: #{tpu_custom_call.1} parent=1 // pred_check
      _
    $region27: #{tpu_custom_call.1} parent=1 // pred_check_branch
      %28 = sbr.rel (0) target = $region29
    $region28: #{tpu_custom_call.1} parent=1 // pred_region
      _
    $region29: #{tpu_custom_call.1} parent=1 // pred_fallthru
      _
    // Predicated region
    $region30: #{tpu_custom_call.1} parent=1 // pred_check
      _
    $region31: #{tpu_custom_call.1} parent=1 // pred_check_branch
      %30 = sbr.rel (0) target = $region33
    $region32: #{tpu_custom_call.1} parent=1 // pred_region
      _
    $region33: #{tpu_custom_call.1} parent=1 // pred_fallthru
      _
    // Predicated region
    $region34: #{tpu_custom_call.1} parent=1 // pred_check
      _
    $region35: #{tpu_custom_call.1} parent=1 // pred_check_branch
      %32 = sbr.rel (0) target = $region37
    $region36: #{tpu_custom_call.1} parent=1 // pred_region
      _
    $region37: #{tpu_custom_call.1} parent=1 // pred_fallthru
      _
    %v33 = vld [vmem:[%s0] sm:$0xff]
    %v34 = vld [vmem:[%s0 + $0x8] sm:$0xff]
    %v35 = vld [vmem:[%s0 + $0x10] sm:$0xff]
    %v36 = vld [vmem:[%s0 + $0x18] sm:$0xff]
    %v37 = vld [vmem:[%s0 + $0x20] sm:$0xff]
    %v38 = vld [vmem:[%s0 + $0x28] sm:$0xff]
    %v39 = vld [vmem:[%s0 + $0x30] sm:$0xff]
    %v40 = vld [vmem:[%s0 + $0x38] sm:$0xff]
    %v41 = vld [vmem:[%s0 + $0x40] sm:$0xff]
    %v42 = vld [vmem:[%s0 + $0x48] sm:$0xff]
    %v43 = vld [vmem:[%s0 + $0x50] sm:$0xff]
    %v44 = vld [vmem:[%s0 + $0x58] sm:$0xff]
    %v45 = vld [vmem:[%s0 + $0x60] sm:$0xff]
    %v46 = vld [vmem:[%s0 + $0x68] sm:$0xff]
    %v47 = vld [vmem:[%s0 + $0x70] sm:$0xff]
    %v48 = vld [vmem:[%s0 + $0x78] sm:$0xff]
    %v49 = vld [vmem:[%s1] sm:$0xff]
    %v50 = vld [vmem:[%s1 + $0x8] sm:$0xff]
    %v51 = vld [vmem:[%s1 + $0x10] sm:$0xff]
    %v52 = vld [vmem:[%s1 + $0x18] sm:$0xff]
    %v53 = vld [vmem:[%s2] sm:$0xff]
    %v54 = vld [vmem:[%s2 + $0x8] sm:$0xff]
    %v55 = vld [vmem:[%s2 + $0x10] sm:$0xff]
    %v56 = vld [vmem:[%s2 + $0x18] sm:$0xff]
    %58 = vset.pattern.permute.xlu0 0
    %59 = vperm.xlu0 %58, %v53
    %v60 = vpop.permute.xlu0 %59
    %63 = vset.pattern.permute.xlu0 0
    %64 = vperm.xlu0 %63, %v54
    %v65 = vpop.permute.xlu0 %64
    %68 = vset.pattern.permute.xlu0 0
    %69 = vperm.xlu0 %68, %v55
    %v70 = vpop.permute.xlu0 %69
    %73 = vset.pattern.permute.xlu0 0
    %74 = vperm.xlu0 %73, %v56
    %v75 = vpop.permute.xlu0 %74
    %vm77 = vcmask 64512
    %v79 = vsel %vm77, %v49, 0
    %v82 = vsel %vm77, %v50, 0
    %v85 = vsel %vm77, %v51, 0
    %v88 = vsel %vm77, %v52, 0
    %v91 = vsel %vm77, %v33, 0
    %v94 = vsel %vm77, %v34, 0
    %v97 = vsel %vm77, %v35, 0
    %v100 = vsel %vm77, %v36, 0
    %v103 = vsel %vm77, %v37, 0
    %v106 = vsel %vm77, %v38, 0
    %v109 = vsel %vm77, %v39, 0
    %v112 = vsel %vm77, %v40, 0
    %v115 = vsel %vm77, %v41, 0
    %v118 = vsel %vm77, %v42, 0
    %v121 = vsel %vm77, %v43, 0
    %v124 = vsel %vm77, %v44, 0
    %v127 = vsel %vm77, %v45, 0
    %v130 = vsel %vm77, %v46, 0
    %v133 = vsel %vm77, %v47, 0
    %v136 = vsel %vm77, %v48, 0
    %138 = vmatpush.xpose.msra.mxu0 %v136
    %139 = vmatpush.xpose.msra.mxu0 %v133
    %140 = vmatpush.xpose.msra.mxu0 %v130
    %141 = vmatpush.xpose.msra.mxu0 %v127
    %142 = vmatpush.xpose.msra.mxu0 %v124
    %143 = vmatpush.xpose.msra.mxu0 %v121
    %144 = vmatpush.xpose.msra.mxu0 %v118
    %145 = vmatpush.xpose.msra.mxu0 %v115
    %146 = vmatpush.xpose.msra.mxu0 %v112
    %147 = vmatpush.xpose.msra.mxu0 %v109
    %148 = vmatpush.xpose.msra.mxu0 %v106
    %149 = vmatpush.xpose.msra.mxu0 %v103
    %150 = vmatpush.xpose.msra.mxu0 %v100
    %151 = vmatpush.xpose.msra.mxu0 %v97
    %152 = vmatpush.xpose.msra.mxu0 %v94
    %153 = vmatpush.xpose.msra.mxu0 %v91
    %154 = vmatmul.f32.gmra.mxu0 %v79
    %v155 = vpop.f32.mrf.mxu0
    %v156 = vadd.f32 %v60, %v155
    %157 = vmatmul.f32.gmra.mxu0 %v82
    %v158 = vpop.f32.mrf.mxu0
    %v159 = vadd.f32 %v65, %v158
    %160 = vmatmul.f32.gmra.mxu0 %v85
    %v161 = vpop.f32.mrf.mxu0
    %v162 = vadd.f32 %v70, %v161
    %163 = vmatmul.f32.gmra.mxu0 %v88
    %v164 = vpop.f32.mrf.mxu0
    %v165 = vadd.f32 %v75, %v164
    %166 = vdwg.mxu0
    %v167 = vmax.f32 %v156, 0.0
    %v168 = vmax.f32 %v159, 0.0
    %v169 = vmax.f32 %v162, 0.0
    %v170 = vmax.f32 %v165, 0.0
    %v171 = vld [vmem:[%s3] sm:$0xff]
    %v172 = vld [vmem:[%s3 + $0x8] sm:$0xff]
    %v173 = vld [vmem:[%s3 + $0x10] sm:$0xff]
    %v174 = vld [vmem:[%s3 + $0x18] sm:$0xff]
    %v175 = vld [vmem:[%s4] sm:$0xff]
    %v176 = vld [vmem:[%s4 + $0x8] sm:$0xff]
    %v177 = vld [vmem:[%s4 + $0x10] sm:$0xff]
    %v178 = vld [vmem:[%s4 + $0x18] sm:$0xff]
    %180 = vset.pattern.permute.xlu0 0
    %181 = vperm.xlu0 %180, %v175
    %v182 = vpop.permute.xlu0 %181
    %185 = vset.pattern.permute.xlu0 0
    %186 = vperm.xlu0 %185, %v176
    %v187 = vpop.permute.xlu0 %186
    %190 = vset.pattern.permute.xlu0 0
    %191 = vperm.xlu0 %190, %v177
    %v192 = vpop.permute.xlu0 %191
    %195 = vset.pattern.permute.xlu0 0
    %196 = vperm.xlu0 %195, %v178
    %v197 = vpop.permute.xlu0 %196
    %vm199 = vcmask 261120
    %v201 = vsel %vm199, %v171, 0
    %v204 = vsel %vm199, %v172, 0
    %v207 = vsel %vm199, %v173, 0
    %v210 = vsel %vm199, %v174, 0
    %212 = vmatpush.msra.mxu0 0.0
    %213 = vmatpush.msra.mxu0 0.0
    %214 = vmatpush.msra.mxu0 0.0
    %215 = vmatpush.msra.mxu0 0.0
    %216 = vmatpush.msra.mxu0 0.0
    %217 = vmatpush.msra.mxu0 0.0
    %218 = vmatpush.msra.mxu0 0.0
    %219 = vmatpush.msra.mxu0 0.0
    %220 = vmatpush.msra.mxu0 0.0
    %221 = vmatpush.msra.mxu0 0.0
    %222 = vmatpush.msra.mxu0 0.0
    %223 = vmatpush.msra.mxu0 0.0
    %224 = vmatpush.msra.mxu0 %v170
    %225 = vmatpush.msra.mxu0 %v169
    %226 = vmatpush.msra.mxu0 %v168
    %227 = vmatpush.msra.mxu0 %v167
    %228 = vmatmul.f32.gmra.mxu0 %v201
    %v229 = vpop.f32.mrf.mxu0
    %v230 = vadd.f32 %v182, %v229
    %231 = vmatmul.f32.gmra.mxu0 %v204
    %v232 = vpop.f32.mrf.mxu0
    %v233 = vadd.f32 %v187, %v232
    %234 = vmatmul.f32.gmra.mxu0 %v207
    %v235 = vpop.f32.mrf.mxu0
    %v236 = vadd.f32 %v192, %v235
    %237 = vmatmul.f32.gmra.mxu0 %v210
    %v238 = vpop.f32.mrf.mxu0
    %v239 = vadd.f32 %v197, %v238
    %240 = vdwg.mxu0
    %v241 = vmax.f32 %v230, 0.0
    %v242 = vmax.f32 %v233, 0.0
    %v243 = vmax.f32 %v236, 0.0
    %v244 = vmax.f32 %v239, 0.0
    %v245 = vld [vmem:[%s5] sm:$0xf]
    %v246 = vld [vmem:[%s6] sm:$0xf]
    %248 = vset.pattern.permute.xlu0 0
    %249 = vperm.xlu0 %248, %v246
    %v250 = vpop.permute.xlu0 %249
    %v253 = vsel %vm199, %v245, 0
    %255 = vmatpush.msra.mxu0 0.0
    %256 = vmatpush.msra.mxu0 0.0
    %257 = vmatpush.msra.mxu0 0.0
    %258 = vmatpush.msra.mxu0 0.0
    %259 = vmatpush.msra.mxu0 0.0
    %260 = vmatpush.msra.mxu0 0.0
    %261 = vmatpush.msra.mxu0 0.0
    %262 = vmatpush.msra.mxu0 0.0
    %263 = vmatpush.msra.mxu0 0.0
    %264 = vmatpush.msra.mxu0 0.0
    %265 = vmatpush.msra.mxu0 0.0
    %266 = vmatpush.msra.mxu0 0.0
    %267 = vmatpush.msra.mxu0 %v244
    %268 = vmatpush.msra.mxu0 %v243
    %269 = vmatpush.msra.mxu0 %v242
    %270 = vmatpush.msra.mxu0 %v241
    %271 = vmatmul.f32.gmra.mxu0 %v253
    %v272 = vpop.f32.mrf.mxu0
    %v273 = vadd.f32 %v250, %v272
    %274 = vdwg.mxu0
    %v275 = vld [vmem:[%s7] sm:$0xf]
    %v276 = vtanh.pop %v273
    %278 = vset.pattern.permute.xlu0 0
    %279 = vperm.xlu0 %278, %v275
    %v280 = vpop.permute.xlu0 %279
    %v282 = vmul.f32 %v280, %v276
    %v283 = vld [vmem:[%s8] sm:$0xf]
    %285 = vset.pattern.permute.xlu0 0
    %286 = vperm.xlu0 %285, %v283
    %v287 = vpop.permute.xlu0 %286
    %v289 = vadd.f32 %v282, %v287
    %290 = vst [vmem:[#allocation2] sm:$0xf] %v289
    // Predicated region
    $region38: #{tpu_custom_call.1} parent=1 // pred_check
      _
    $region39: #{tpu_custom_call.1} parent=1 // pred_check_branch
      %292 = sbr.rel (0) target = $region41
    $region40: #{tpu_custom_call.1} parent=1 // pred_region
      %294 = vsyncadd [#allocation3], 0
      %s296 = sshll.u32 [#allocation2], 4
      %s297 = int_to_ptr.vmem [resolvable:$true] %s296
      %s298 = sshll.u32 %s9, 4
      %s299 = int_to_ptr.hbm [resolvable:$true] %s298
      %301 = dma.vmem_to_hbm [thread:$0]  %s297, 64, %s299, [#allocation3]
    $region41: #{tpu_custom_call.1} parent=1 // pred_fallthru
      _
    // Predicated region
    $region42: #{tpu_custom_call.1} parent=1 // pred_check
      _
    $region43: #{tpu_custom_call.1} parent=1 // pred_check_branch
      %303 = sbr.rel (0) target = $region45
    $region44: #{tpu_custom_call.1} parent=1 // pred_region
      %305 = dma.done [#allocation3], 64
    $region45: #{tpu_custom_call.1} parent=1 // pred_fallthru
      _
    %306 = vsyncpa [#allocation3], 1

</llo_original>
